<compile_context>
chip_gen: v7x
topology: tpu7x:2x2x1
jax: 0.10.0
libtpu: 0.0.40
codegen_flags: <defaults>
</compile_context>

<pallas_src>
import jax
import jax.numpy as jnp
from jax.experimental import pallas as pl
from jax.experimental.pallas import tpu as pltpu


def attention_kernel(x_ref, wqT_ref, bq_ref, w0T_ref, w1T_ref, b1_ref,
                     wpT_ref, bp_ref, o_ref):
    bt, n, c = x_ref.shape
    in_dim = wqT_ref.shape[1]
    k = w0T_ref.shape[1]

    # One tall GEMM over every token row handled by this grid step.
    # (Bt, N, C) -> (Bt*N, C) is a leading-dim merge (N is a multiple of 8),
    # i.e. layout-preserving and essentially free.
    x = x_ref[...].reshape(bt * n, c)

    # q_linear: (Bt*N, C) @ (C, in_dim) + b   (weights pre-transposed outside)
    q = jnp.dot(x, wqT_ref[...], preferred_element_type=jnp.float32)
    q = q + bq_ref[...]                                   # f32 (Bt*N, in_dim)

    # linear_0 (no bias): (Bt*N, in_dim) @ (in_dim, k)
    s = jnp.dot(q, w0T_ref[...], preferred_element_type=jnp.float32)

    # softmax over the token axis N, per batch -> need the (Bt, N, k) view.
    s3 = s.reshape(bt, n, k)
    s3 = s3 - jnp.max(s3, axis=1, keepdims=True)
    p = jnp.exp(s3)
    inv_col = pl.reciprocal(jnp.sum(p, axis=1, keepdims=True), approx=False)
    p = p * inv_col
    # normalize by the sum over the k axis
    inv_row = pl.reciprocal(1e-9 + jnp.sum(p, axis=2, keepdims=True),
                            approx=False)
    a = (p * inv_row).reshape(bt * n, k)

    # attn_drop / proj_drop have p=0.0 -> identity.

    # linear_1: (Bt*N, k) @ (k, in_dim) + b
    y = jnp.dot(a, w1T_ref[...], preferred_element_type=jnp.float32)
    y = y + b1_ref[...]
    # proj: (Bt*N, in_dim) @ (in_dim, in_dim) + b
    y = jnp.dot(y, wpT_ref[...], preferred_element_type=jnp.float32)
    y = y + bp_ref[...]

    # residual with idn (= q_linear output)
    o_ref[...] = (q + y).reshape(bt, n, in_dim).astype(o_ref.dtype)


def _pick_batch_block(B, N, C, in_dim, k):
    """Pick batches-per-step: as many as fit VMEM, but keep >=2 grid steps."""
    # f32 working set per batch inside a step (x, q, scores, attn, y, out).
    per_batch = 4 * N * (C + 3 * in_dim + 2 * k)
    budget = 24 * 1024 * 1024              # stay well under v7x's 64 MiB VMEM
    max_bt = max(1, budget // max(per_batch, 1))
    # >= 2 parallel grid steps lets both v7x TensorCores work; otherwise pack
    # everything into a single step.
    target = B // 2 if B >= 2 else B
    bt = int(max(1, min(target, max_bt, B)))
    while B % bt:
        bt -= 1
    return bt


def attention_forward(x, wq, bq, w0, w1, b1, wp, bp, batch_block=None):
    B, N, C = x.shape
    in_dim = wq.shape[0]
    k = w0.shape[0]

    bt = batch_block if batch_block is not None else _pick_batch_block(
        B, N, C, in_dim, k)
    assert B % bt == 0
    grid = (B // bt,)

    # Pre-transpose weights once, OUTSIDE the kernel: PyTorch W[out, in] ->
    # (in, out), so the kernel runs plain row-major GEMMs.
    wqT = jnp.transpose(wq)    # (C, in_dim)
    w0T = jnp.transpose(w0)    # (in_dim, k)
    w1T = jnp.transpose(w1)    # (k, in_dim)
    wpT = jnp.transpose(wp)    # (in_dim, in_dim)

    full2d = lambda a: pl.BlockSpec(a.shape, lambda g: (0, 0))

    flops = 2 * B * N * (C * in_dim + in_dim * k + k * in_dim + in_dim * in_dim)
    bytes_accessed = 4 * (x.size + B * N * in_dim + wqT.size + w0T.size
                          + w1T.size + wpT.size + bq.size + b1.size + bp.size)
    cost = pl.CostEstimate(flops=flops, transcendentals=B * N * k,
                           bytes_accessed=bytes_accessed)

    block_bytes = 4 * bt * N * (C + 3 * in_dim + 2 * k)
    weight_bytes = 4 * (wqT.size + w0T.size + w1T.size + wpT.size
                        + bq.size + b1.size + bp.size)
    vmem_limit = int(min(max(4 * (block_bytes + weight_bytes), 16 << 20),
                         48 << 20))

    return pl.pallas_call(
        attention_kernel,
        out_shape=jax.ShapeDtypeStruct((B, N, in_dim), x.dtype),
        grid_spec=pltpu.PrefetchScalarGridSpec(
            num_scalar_prefetch=0,
            grid=grid,
            in_specs=[
                pl.BlockSpec((bt, N, C), lambda g: (g, 0, 0)),
                full2d(wqT), full2d(bq),
                full2d(w0T),
                full2d(w1T), full2d(b1),
                full2d(wpT), full2d(bp),
            ],
            out_specs=pl.BlockSpec((bt, N, in_dim), lambda g: (g, 0, 0)),
        ),
        compiler_params=pltpu.CompilerParams(
            dimension_semantics=("parallel",),
            vmem_limit_bytes=vmem_limit),
        cost_estimate=cost,
    )(x, wqT, bq, w0T, w1T, b1, wpT, bp)


def reference_forward(x, wq, bq, w0, w1, b1, wp, bp):
    q = jnp.einsum('bnc,dc->bnd', x, wq) + bq            # (B, N, in_dim)
    a = jnp.einsum('bnd,kd->bnk', q, w0)                 # (B, N, k)
    a = jax.nn.softmax(a, axis=-2)
    a = a / (1e-9 + jnp.sum(a, axis=-1, keepdims=True))
    y = jnp.einsum('bnk,dk->bnd', a, w1) + b1
    y = jnp.einsum('bnd,ed->bne', y, wp) + bp
    return q + y


if __name__ == "__main__":
    # Small shapes consistent with the module: dim=C, in_dim, k=128 fixed.
    B, N, C = 2, 8, 4
    in_dim, k = 32, 128

    key = jax.random.PRNGKey(0)
    keys = jax.random.split(key, 8)

    x = jax.random.normal(keys[0], (B, N, C), dtype=jnp.float32)

    # Deterministic parameter init (uniform, PyTorch-Linear-like fan_in scale).
    def init_w(kk, out_f, in_f):
        bound = 1.0 / (in_f ** 0.5)
        return jax.random.uniform(kk, (out_f, in_f), jnp.float32, -bound, bound)

    def init_b(kk, out_f, in_f):
        bound = 1.0 / (in_f ** 0.5)
        return jax.random.uniform(kk, (1, out_f), jnp.float32, -bound, bound)

    wq = init_w(keys[1], in_dim, C)          # q_linear.weight  (in_dim, C)
    bq = init_b(keys[2], in_dim, C)          # q_linear.bias    (1, in_dim)
    w0 = init_w(keys[3], k, in_dim)          # linear_0.weight  (k, in_dim), no bias
    w1 = jnp.transpose(w0)                   # linear_1.weight = linear_0.weight.T
    b1 = init_b(keys[4], in_dim, k)          # linear_1.bias    (1, in_dim)
    wp = init_w(keys[5], in_dim, in_dim)     # proj.weight      (in_dim, in_dim)
    bp = init_b(keys[6], in_dim, in_dim)     # proj.bias        (1, in_dim)

    out = attention_forward(x, wq, bq, w0, w1, b1, wp, bp)
    out = jax.block_until_ready(out)

    ref = reference_forward(x, wq, bq, w0, w1, b1, wp, bp)
    assert out.shape == (B, N, in_dim)
    assert jnp.allclose(out, ref, atol=1e-5, rtol=1e-5)

    print("KERNEL_OK")
</pallas_src>

<mosaic_0001>
module attributes {stable_mosaic.version = 11 : i64} {
  func.func @attention_kernel(%arg0: i32, %arg1: memref<1x8x4xf32, #tpu.memory_space<vmem>>, %arg2: memref<4x32xf32, #tpu.memory_space<vmem>>, %arg3: memref<1x32xf32, #tpu.memory_space<vmem>>, %arg4: memref<32x128xf32, #tpu.memory_space<vmem>>, %arg5: memref<128x32xf32, #tpu.memory_space<vmem>>, %arg6: memref<1x32xf32, #tpu.memory_space<vmem>>, %arg7: memref<32x32xf32, #tpu.memory_space<vmem>>, %arg8: memref<1x32xf32, #tpu.memory_space<vmem>>, %arg9: memref<1x8x32xf32, #tpu.memory_space<vmem>>) attributes {dimension_semantics = [#tpu.dimension_semantics<parallel>], iteration_bounds = array<i64: 2>, scalar_prefetch = 0 : i64, scratch_operands = 0 : i64, tpu.core_type = #tpu.core_type<tc>, window_params = [{transform_indices = @transform_0, window_bounds = array<i64: 1, 8, 4>}, {pipeline_mode = #tpu.pipeline_mode<synchronous>, transform_indices = @transform_1, window_bounds = array<i64: 4, 32>}, {pipeline_mode = #tpu.pipeline_mode<synchronous>, transform_indices = @transform_2, window_bounds = array<i64: 1, 32>}, {pipeline_mode = #tpu.pipeline_mode<synchronous>, transform_indices = @transform_3, window_bounds = array<i64: 32, 128>}, {pipeline_mode = #tpu.pipeline_mode<synchronous>, transform_indices = @transform_4, window_bounds = array<i64: 128, 32>}, {pipeline_mode = #tpu.pipeline_mode<synchronous>, transform_indices = @transform_5, window_bounds = array<i64: 1, 32>}, {pipeline_mode = #tpu.pipeline_mode<synchronous>, transform_indices = @transform_6, window_bounds = array<i64: 32, 32>}, {pipeline_mode = #tpu.pipeline_mode<synchronous>, transform_indices = @transform_7, window_bounds = array<i64: 1, 32>}, {transform_indices = @transform_8, window_bounds = array<i64: 1, 8, 32>}]} {
    %c0 = arith.constant 0 : index
    %c0_0 = arith.constant 0 : index
    %c0_1 = arith.constant 0 : index
    %0 = vector.load %arg1[%c0, %c0_0, %c0_1] : memref<1x8x4xf32, #tpu.memory_space<vmem>>, vector<1x8x4xf32>
    %1 = vector.shape_cast %0 : vector<1x8x4xf32> to vector<8x4xf32>
    %c0_2 = arith.constant 0 : index
    %c0_3 = arith.constant 0 : index
    %2 = vector.load %arg2[%c0_2, %c0_3] : memref<4x32xf32, #tpu.memory_space<vmem>>, vector<4x32xf32>
    %cst = arith.constant dense<0.000000e+00> : vector<8x32xf32>
    %3 = tpu.matmul %1, %2, %cst {dimension_numbers = #tpu.dot_dimension_numbers<[1], [0], [0], [1], [0, 0, 1, 1], [], []>} : vector<8x4xf32>, vector<4x32xf32>, vector<8x32xf32> -> vector<8x32xf32>
    %c0_4 = arith.constant 0 : index
    %c0_5 = arith.constant 0 : index
    %4 = vector.load %arg3[%c0_4, %c0_5] : memref<1x32xf32, #tpu.memory_space<vmem>>, vector<1x32xf32>
    %5 = vector.broadcast %4 : vector<1x32xf32> to vector<8x32xf32>
    %6 = arith.addf %3, %5 : vector<8x32xf32>
    %c0_6 = arith.constant 0 : index
    %c0_7 = arith.constant 0 : index
    %7 = vector.load %arg4[%c0_6, %c0_7] : memref<32x128xf32, #tpu.memory_space<vmem>>, vector<32x128xf32>
    %cst_8 = arith.constant dense<0.000000e+00> : vector<8x128xf32>
    %8 = tpu.matmul %6, %7, %cst_8 {dimension_numbers = #tpu.dot_dimension_numbers<[1], [0], [0], [1], [0, 0, 1, 1], [], []>} : vector<8x32xf32>, vector<32x128xf32>, vector<8x128xf32> -> vector<8x128xf32>
    %9 = vector.shape_cast %8 : vector<8x128xf32> to vector<1x8x128xf32>
    %cst_9 = arith.constant dense<0xFF800000> : vector<1x128xf32>
    %10 = vector.multi_reduction <maximumf>, %9, %cst_9 [1] : vector<1x8x128xf32> to vector<1x128xf32>
    %11 = vector.shape_cast %10 : vector<1x128xf32> to vector<1x1x128xf32>
    %12 = vector.broadcast %11 : vector<1x1x128xf32> to vector<1x8x128xf32>
    %13 = arith.subf %9, %12 : vector<1x8x128xf32>
    %14 = math.exp %13 : vector<1x8x128xf32>
    %cst_10 = arith.constant dense<0.000000e+00> : vector<1x128xf32>
    %15 = vector.multi_reduction <add>, %14, %cst_10 [1] : vector<1x8x128xf32> to vector<1x128xf32>
    %16 = vector.shape_cast %15 : vector<1x128xf32> to vector<1x1x128xf32>
    %17 = tpu.reciprocal %16 : vector<1x1x128xf32> -> vector<1x1x128xf32>
    %18 = vector.broadcast %17 : vector<1x1x128xf32> to vector<1x8x128xf32>
    %19 = arith.mulf %14, %18 : vector<1x8x128xf32>
    %cst_11 = arith.constant dense<0.000000e+00> : vector<1x8xf32>
    %20 = vector.multi_reduction <add>, %19, %cst_11 [2] : vector<1x8x128xf32> to vector<1x8xf32>
    %21 = vector.shape_cast %20 : vector<1x8xf32> to vector<1x8x1xf32>
    %cst_12 = arith.constant 9.99999971E-10 : f32
    %22 = vector.broadcast %cst_12 : f32 to vector<1x8x1xf32>
    %23 = arith.addf %22, %21 : vector<1x8x1xf32>
    %24 = tpu.reciprocal %23 : vector<1x8x1xf32> -> vector<1x8x1xf32>
    %25 = vector.broadcast %24 : vector<1x8x1xf32> to vector<1x8x128xf32>
    %26 = arith.mulf %19, %25 : vector<1x8x128xf32>
    %27 = vector.shape_cast %26 : vector<1x8x128xf32> to vector<8x128xf32>
    %c0_13 = arith.constant 0 : index
    %c0_14 = arith.constant 0 : index
    %28 = vector.load %arg5[%c0_13, %c0_14] : memref<128x32xf32, #tpu.memory_space<vmem>>, vector<128x32xf32>
    %cst_15 = arith.constant dense<0.000000e+00> : vector<8x32xf32>
    %29 = tpu.matmul %27, %28, %cst_15 {dimension_numbers = #tpu.dot_dimension_numbers<[1], [0], [0], [1], [0, 0, 1, 1], [], []>} : vector<8x128xf32>, vector<128x32xf32>, vector<8x32xf32> -> vector<8x32xf32>
    %c0_16 = arith.constant 0 : index
    %c0_17 = arith.constant 0 : index
    %30 = vector.load %arg6[%c0_16, %c0_17] : memref<1x32xf32, #tpu.memory_space<vmem>>, vector<1x32xf32>
    %31 = vector.broadcast %30 : vector<1x32xf32> to vector<8x32xf32>
    %32 = arith.addf %29, %31 : vector<8x32xf32>
    %c0_18 = arith.constant 0 : index
    %c0_19 = arith.constant 0 : index
    %33 = vector.load %arg7[%c0_18, %c0_19] : memref<32x32xf32, #tpu.memory_space<vmem>>, vector<32x32xf32>
    %cst_20 = arith.constant dense<0.000000e+00> : vector<8x32xf32>
    %34 = tpu.matmul %32, %33, %cst_20 {dimension_numbers = #tpu.dot_dimension_numbers<[1], [0], [0], [1], [0, 0, 1, 1], [], []>} : vector<8x32xf32>, vector<32x32xf32>, vector<8x32xf32> -> vector<8x32xf32>
    %c0_21 = arith.constant 0 : index
    %c0_22 = arith.constant 0 : index
    %35 = vector.load %arg8[%c0_21, %c0_22] : memref<1x32xf32, #tpu.memory_space<vmem>>, vector<1x32xf32>
    %36 = vector.broadcast %35 : vector<1x32xf32> to vector<8x32xf32>
    %37 = arith.addf %34, %36 : vector<8x32xf32>
    %38 = arith.addf %6, %37 : vector<8x32xf32>
    %39 = vector.shape_cast %38 : vector<8x32xf32> to vector<1x8x32xf32>
    %c0_23 = arith.constant 0 : index
    %c0_24 = arith.constant 0 : index
    %c0_25 = arith.constant 0 : index
    %40 = vector.load %arg9[%c0_23, %c0_24, %c0_25] : memref<1x8x32xf32, #tpu.memory_space<vmem>>, vector<1x8x32xf32>
    tpu.vector_store %arg9[%c0_23, %c0_24, %c0_25], %39 {strides = array<i32>} : memref<1x8x32xf32, #tpu.memory_space<vmem>>, vector<1x8x32xf32>,
    return
  }
  func.func @transform_0(%arg0: i32) -> (i32, i32, i32) {
    %c0_i32 = arith.constant 0 : i32
    %c0_i32_0 = arith.constant 0 : i32
    %c0_i32_1 = arith.constant 0 : i32
    return %arg0, %c0_i32, %c0_i32_0 : i32, i32, i32
  }
  func.func @transform_1(%arg0: i32) -> (i32, i32) {
    %c0_i32 = arith.constant 0 : i32
    %c0_i32_0 = arith.constant 0 : i32
    %c0_i32_1 = arith.constant 0 : i32
    return %c0_i32, %c0_i32_0 : i32, i32
  }
  func.func @transform_2(%arg0: i32) -> (i32, i32) {
    %c0_i32 = arith.constant 0 : i32
    %c0_i32_0 = arith.constant 0 : i32
    %c0_i32_1 = arith.constant 0 : i32
    return %c0_i32, %c0_i32_0 : i32, i32
  }
  func.func @transform_3(%arg0: i32) -> (i32, i32) {
    %c0_i32 = arith.constant 0 : i32
    %c0_i32_0 = arith.constant 0 : i32
    %c0_i32_1 = arith.constant 0 : i32
    return %c0_i32, %c0_i32_0 : i32, i32
  }
  func.func @transform_4(%arg0: i32) -> (i32, i32) {
    %c0_i32 = arith.constant 0 : i32
    %c0_i32_0 = arith.constant 0 : i32
    %c0_i32_1 = arith.constant 0 : i32
    return %c0_i32, %c0_i32_0 : i32, i32
  }
  func.func @transform_5(%arg0: i32) -> (i32, i32) {
    %c0_i32 = arith.constant 0 : i32
    %c0_i32_0 = arith.constant 0 : i32
    %c0_i32_1 = arith.constant 0 : i32
    return %c0_i32, %c0_i32_0 : i32, i32
  }
  func.func @transform_6(%arg0: i32) -> (i32, i32) {
    %c0_i32 = arith.constant 0 : i32
    %c0_i32_0 = arith.constant 0 : i32
    %c0_i32_1 = arith.constant 0 : i32
    return %c0_i32, %c0_i32_0 : i32, i32
  }
  func.func @transform_7(%arg0: i32) -> (i32, i32) {
    %c0_i32 = arith.constant 0 : i32
    %c0_i32_0 = arith.constant 0 : i32
    %c0_i32_1 = arith.constant 0 : i32
    return %c0_i32, %c0_i32_0 : i32, i32
  }
  func.func @transform_8(%arg0: i32) -> (i32, i32, i32) {
    %c0_i32 = arith.constant 0 : i32
    %c0_i32_0 = arith.constant 0 : i32
    %c0_i32_1 = arith.constant 0 : i32
    return %arg0, %c0_i32, %c0_i32_0 : i32, i32, i32
  }
}

</mosaic_0001>

<llo_original>
// kernel: tpu_custom_call.1
$region0: #{tpu_custom_call.1}
  #allocation0 [shape = 'u32[]', space=smem, size = 0x4, offset = 0x4, fixed_abs, tag = 'smem constant byte address 0x4 - core index']
  #allocation1 [shape = 'u32[144,128]{1,0:T(1,128)}', space=vmem, size = 0x12000, scoped, tag = 'internal scratch']
  %s0 = inlined_call_operand.vmem [shape: f32[2,8,4], index: 0, kind: input, shape index: {}]
  %s1 = inlined_call_operand.vmem [shape: f32[4,32], index: 1, kind: input, shape index: {}]
  %s2 = inlined_call_operand.vmem [shape: f32[1,32], index: 2, kind: input, shape index: {}]
  %s3 = inlined_call_operand.vmem [shape: f32[32,128], index: 3, kind: input, shape index: {}]
  %s4 = inlined_call_operand.vmem [shape: f32[128,32], index: 4, kind: input, shape index: {}]
  %s5 = inlined_call_operand.vmem [shape: f32[1,32], index: 5, kind: input, shape index: {}]
  %s6 = inlined_call_operand.vmem [shape: f32[32,32], index: 6, kind: input, shape index: {}]
  %s7 = inlined_call_operand.vmem [shape: f32[1,32], index: 7, kind: input, shape index: {}]
  %s8 = inlined_call_operand.hbm [shape: f32[2,8,32], index: 8, kind: output, shape index: {}]
  %s9 = sld [smem:[#allocation0]]
  $region65: #{tpu_custom_call.1} parent=0
    _
  %s11 = ssub.s32 1, %s9
  %s12 = scalar_select 0, %s11, %s9
  $region1: #{tpu_custom_call.1} parent=0
    #allocation2 [shape = 'u8[8192]{0}', space=vmem, size = 0x2000, scoped, tag = 'output window, operand 0']
    #allocation3 [shape = 's32[2]{0}', space=sflag, size = 0x8, scoped, tag = 'scoped memory for tpu_custom_call.1']
    %13 = vsyncpa [#allocation3], 0
    %s14 = scalar_lea.sflag [#allocation3], 1
    %15 = vsyncpa %s14, 0
    loop: start=0, step=1, limit=4
    $region2: #{tpu_custom_call.1} parent=1 // loop_pre_header
      _
    $region3: #{tpu_custom_call.1} parent=1 // loop_header
      %s17 = sphi 0, %s21
      %p18 = scmp.ge.s32.totalorder %s17, 4
      %s27 = sphi 0, %s29
      %s30 = sphi 0, %s27
      %s31 = sphi 0, %s30
      %s47 = sphi 0, %s31
      %s51 = sphi 0, %s51
      %s53 = sphi 0, %s51
      %s54 = sphi 0, %s53
      %s68 = sphi 0, %s54
      %s72 = sphi 0, %s72
      %s74 = sphi 0, %s72
      %s75 = sphi 0, %s74
      %s89 = sphi 0, %s75
      %s93 = sphi 0, %s93
      %s95 = sphi 0, %s93
      %s96 = sphi 0, %s95
      %s110 = sphi 0, %s96
      %s114 = sphi 0, %s114
      %s116 = sphi 0, %s114
      %s117 = sphi 0, %s116
      %s131 = sphi 0, %s117
      %s135 = sphi 0, %s135
      %s137 = sphi 0, %s135
      %s138 = sphi 0, %s137
      %s152 = sphi 0, %s138
      %s156 = sphi 0, %s156
      %s158 = sphi 0, %s156
      %s159 = sphi 0, %s158
      %s173 = sphi 0, %s159
      %s177 = sphi 0, %s177
      %s179 = sphi 0, %s177
      %s180 = sphi 0, %s179
      %s194 = sphi 0, %s180
      %s200 = sphi 0, %s202
      %s203 = sphi 0, %s200
      %s204 = sphi 0, %s203
      %s220 = sphi 0, %s204
    $region4: #{tpu_custom_call.1} parent=1 // loop_header_branch
      %20 = sbr.rel (%p18) target = $region8
    $region5: #{tpu_custom_call.1} parent=1 // loop_body
      %s22 = ssub.s32 %s17, 1
      %s23 = ssub.s32 %s17, 2
      %s24 = sadd.s32 %s17, 1
      %s25 = ssub.s32 %s17, %s24
      %p26 = scmp.eq.s32.totalorder %s25, 0
      %s28 = sadd.s32 %s27, 1
      %s29 = scalar_select %p26, %s27, %s28
      %p32 = pneg %p26
      %p33 = scmp.eq.s32.totalorder %s17, 1
      %p34 = por %p32, %p33
      %p35 = scmp.ne.s32.totalorder %s27, %s30
      %p36 = scmp.eq.s32.totalorder %s17, 0
      %p37 = por %p35, %p36
      %p38 = scmp.ne.s32.totalorder %s27, %s30
      %p39 = scmp.eq.s32.totalorder %s22, 1
      %p40 = por %p38, %p39
      %p41 = scmp.ne.s32.totalorder %s30, %s31
      %p42 = scmp.eq.s32.totalorder %s22, 0
      %p43 = por %p41, %p42
      %p44 = scmp.ne.s32.totalorder %s30, %s31
      %p45 = scmp.eq.s32.totalorder %s23, 1
      %p46 = por %p44, %p45
      %p48 = scmp.ne.s32.totalorder %s31, %s47
      %p49 = scmp.eq.s32.totalorder %s23, 0
      %p50 = por %p48, %p49
      %s52 = sadd.s32 %s51, 1
      %p55 = scmp.eq.s32.totalorder %s17, 1
      %p56 = scmp.ne.s32.totalorder %s51, %s53
      %p57 = scmp.eq.s32.totalorder %s17, 0
      %p58 = por %p56, %p57
      %p59 = scmp.ne.s32.totalorder %s51, %s53
      %p60 = scmp.eq.s32.totalorder %s22, 1
      %p61 = por %p59, %p60
      %p62 = scmp.ne.s32.totalorder %s53, %s54
      %p63 = scmp.eq.s32.totalorder %s22, 0
      %p64 = por %p62, %p63
      %p65 = scmp.ne.s32.totalorder %s53, %s54
      %p66 = scmp.eq.s32.totalorder %s23, 1
      %p67 = por %p65, %p66
      %p69 = scmp.ne.s32.totalorder %s54, %s68
      %p70 = scmp.eq.s32.totalorder %s23, 0
      %p71 = por %p69, %p70
      %s73 = sadd.s32 %s72, 1
      %p76 = scmp.eq.s32.totalorder %s17, 1
      %p77 = scmp.ne.s32.totalorder %s72, %s74
      %p78 = scmp.eq.s32.totalorder %s17, 0
      %p79 = por %p77, %p78
      %p80 = scmp.ne.s32.totalorder %s72, %s74
      %p81 = scmp.eq.s32.totalorder %s22, 1
      %p82 = por %p80, %p81
      %p83 = scmp.ne.s32.totalorder %s74, %s75
      %p84 = scmp.eq.s32.totalorder %s22, 0
      %p85 = por %p83, %p84
      %p86 = scmp.ne.s32.totalorder %s74, %s75
      %p87 = scmp.eq.s32.totalorder %s23, 1
      %p88 = por %p86, %p87
      %p90 = scmp.ne.s32.totalorder %s75, %s89
      %p91 = scmp.eq.s32.totalorder %s23, 0
      %p92 = por %p90, %p91
      %s94 = sadd.s32 %s93, 1
      %p97 = scmp.eq.s32.totalorder %s17, 1
      %p98 = scmp.ne.s32.totalorder %s93, %s95
      %p99 = scmp.eq.s32.totalorder %s17, 0
      %p100 = por %p98, %p99
      %p101 = scmp.ne.s32.totalorder %s93, %s95
      %p102 = scmp.eq.s32.totalorder %s22, 1
      %p103 = por %p101, %p102
      %p104 = scmp.ne.s32.totalorder %s95, %s96
      %p105 = scmp.eq.s32.totalorder %s22, 0
      %p106 = por %p104, %p105
      %p107 = scmp.ne.s32.totalorder %s95, %s96
      %p108 = scmp.eq.s32.totalorder %s23, 1
      %p109 = por %p107, %p108
      %p111 = scmp.ne.s32.totalorder %s96, %s110
      %p112 = scmp.eq.s32.totalorder %s23, 0
      %p113 = por %p111, %p112
      %s115 = sadd.s32 %s114, 1
      %p118 = scmp.eq.s32.totalorder %s17, 1
      %p119 = scmp.ne.s32.totalorder %s114, %s116
      %p120 = scmp.eq.s32.totalorder %s17, 0
      %p121 = por %p119, %p120
      %p122 = scmp.ne.s32.totalorder %s114, %s116
      %p123 = scmp.eq.s32.totalorder %s22, 1
      %p124 = por %p122, %p123
      %p125 = scmp.ne.s32.totalorder %s116, %s117
      %p126 = scmp.eq.s32.totalorder %s22, 0
      %p127 = por %p125, %p126
      %p128 = scmp.ne.s32.totalorder %s116, %s117
      %p129 = scmp.eq.s32.totalorder %s23, 1
      %p130 = por %p128, %p129
      %p132 = scmp.ne.s32.totalorder %s117, %s131
      %p133 = scmp.eq.s32.totalorder %s23, 0
      %p134 = por %p132, %p133
      %s136 = sadd.s32 %s135, 1
      %p139 = scmp.eq.s32.totalorder %s17, 1
      %p140 = scmp.ne.s32.totalorder %s135, %s137
      %p141 = scmp.eq.s32.totalorder %s17, 0
      %p142 = por %p140, %p141
      %p143 = scmp.ne.s32.totalorder %s135, %s137
      %p144 = scmp.eq.s32.totalorder %s22, 1
      %p145 = por %p143, %p144
      %p146 = scmp.ne.s32.totalorder %s137, %s138
      %p147 = scmp.eq.s32.totalorder %s22, 0
      %p148 = por %p146, %p147
      %p149 = scmp.ne.s32.totalorder %s137, %s138
      %p150 = scmp.eq.s32.totalorder %s23, 1
      %p151 = por %p149, %p150
      %p153 = scmp.ne.s32.totalorder %s138, %s152
      %p154 = scmp.eq.s32.totalorder %s23, 0
      %p155 = por %p153, %p154
      %s157 = sadd.s32 %s156, 1
      %p160 = scmp.eq.s32.totalorder %s17, 1
      %p161 = scmp.ne.s32.totalorder %s156, %s158
      %p162 = scmp.eq.s32.totalorder %s17, 0
      %p163 = por %p161, %p162
      %p164 = scmp.ne.s32.totalorder %s156, %s158
      %p165 = scmp.eq.s32.totalorder %s22, 1
      %p166 = por %p164, %p165
      %p167 = scmp.ne.s32.totalorder %s158, %s159
      %p168 = scmp.eq.s32.totalorder %s22, 0
      %p169 = por %p167, %p168
      %p170 = scmp.ne.s32.totalorder %s158, %s159
      %p171 = scmp.eq.s32.totalorder %s23, 1
      %p172 = por %p170, %p171
      %p174 = scmp.ne.s32.totalorder %s159, %s173
      %p175 = scmp.eq.s32.totalorder %s23, 0
      %p176 = por %p174, %p175
      %s178 = sadd.s32 %s177, 1
      %p181 = scmp.eq.s32.totalorder %s17, 1
      %p182 = scmp.ne.s32.totalorder %s177, %s179
      %p183 = scmp.eq.s32.totalorder %s17, 0
      %p184 = por %p182, %p183
      %p185 = scmp.ne.s32.totalorder %s177, %s179
      %p186 = scmp.eq.s32.totalorder %s22, 1
      %p187 = por %p185, %p186
      %p188 = scmp.ne.s32.totalorder %s179, %s180
      %p189 = scmp.eq.s32.totalorder %s22, 0
      %p190 = por %p188, %p189
      %p191 = scmp.ne.s32.totalorder %s179, %s180
      %p192 = scmp.eq.s32.totalorder %s23, 1
      %p193 = por %p191, %p192
      %p195 = scmp.ne.s32.totalorder %s180, %s194
      %p196 = scmp.eq.s32.totalorder %s23, 0
      %p197 = por %p195, %p196
      %s198 = ssub.s32 %s17, %s24
      %p199 = scmp.eq.s32.totalorder %s198, 0
      %s201 = sadd.s32 %s200, 1
      %s202 = scalar_select %p199, %s200, %s201
      %p205 = pneg %p199
      %p206 = scmp.eq.s32.totalorder %s17, 1
      %p207 = por %p205, %p206
      %p208 = scmp.ne.s32.totalorder %s200, %s203
      %p209 = scmp.eq.s32.totalorder %s17, 0
      %p210 = por %p208, %p209
      %p211 = scmp.ne.s32.totalorder %s200, %s203
      %p212 = scmp.eq.s32.totalorder %s22, 1
      %p213 = por %p211, %p212
      %p214 = scmp.ne.s32.totalorder %s203, %s204
      %p215 = scmp.eq.s32.totalorder %s22, 0
      %p216 = por %p214, %p215
      %p217 = scmp.ne.s32.totalorder %s203, %s204
      %p218 = scmp.eq.s32.totalorder %s23, 1
      %p219 = por %p217, %p218
      %p221 = scmp.ne.s32.totalorder %s204, %s220
      %p222 = scmp.eq.s32.totalorder %s23, 0
      %p223 = por %p221, %p222
      %p224 = scmp.le.s32.totalorder 1, %s17
      %p225 = scmp.lt.s32.totalorder %s17, 3
      %p226 = pnand %p224, %p225
      %p227 = pneg %p226
      // Predicated region
      $region9: #{tpu_custom_call.1} parent=5 // pred_check
        _
      $region10: #{tpu_custom_call.1} parent=5 // pred_check_branch
        %229 = sbr.rel (%p226) target = $region12
      $region11: #{tpu_custom_call.1} parent=5 // pred_region
        %s230 = ssub.s32 %s17, 1
        // Predicated region
        $region13: #{tpu_custom_call.1} parent=11 // pred_check
          %p231 = pneg %p64
        $region14: #{tpu_custom_call.1} parent=11 // pred_check_branch
          %233 = sbr.rel (%p231) target = $region16
        $region15: #{tpu_custom_call.1} parent=11 // pred_region
          _
        $region16: #{tpu_custom_call.1} parent=11 // pred_fallthru
          _
        // Predicated region
        $region17: #{tpu_custom_call.1} parent=11 // pred_check
          %p234 = pneg %p85
        $region18: #{tpu_custom_call.1} parent=11 // pred_check_branch
          %236 = sbr.rel (%p234) target = $region20
        $region19: #{tpu_custom_call.1} parent=11 // pred_region
          _
        $region20: #{tpu_custom_call.1} parent=11 // pred_fallthru
          _
        // Predicated region
        $region21: #{tpu_custom_call.1} parent=11 // pred_check
          %p237 = pneg %p106
        $region22: #{tpu_custom_call.1} parent=11 // pred_check_branch
          %239 = sbr.rel (%p237) target = $region24
        $region23: #{tpu_custom_call.1} parent=11 // pred_region
          _
        $region24: #{tpu_custom_call.1} parent=11 // pred_fallthru
          _
        // Predicated region
        $region25: #{tpu_custom_call.1} parent=11 // pred_check
          %p240 = pneg %p127
        $region26: #{tpu_custom_call.1} parent=11 // pred_check_branch
          %242 = sbr.rel (%p240) target = $region28
        $region27: #{tpu_custom_call.1} parent=11 // pred_region
          _
        $region28: #{tpu_custom_call.1} parent=11 // pred_fallthru
          _
        // Predicated region
        $region29: #{tpu_custom_call.1} parent=11 // pred_check
          %p243 = pneg %p148
        $region30: #{tpu_custom_call.1} parent=11 // pred_check_branch
          %245 = sbr.rel (%p243) target = $region32
        $region31: #{tpu_custom_call.1} parent=11 // pred_region
          _
        $region32: #{tpu_custom_call.1} parent=11 // pred_fallthru
          _
        // Predicated region
        $region33: #{tpu_custom_call.1} parent=11 // pred_check
          %p246 = pneg %p169
        $region34: #{tpu_custom_call.1} parent=11 // pred_check_branch
          %248 = sbr.rel (%p246) target = $region36
        $region35: #{tpu_custom_call.1} parent=11 // pred_region
          _
        $region36: #{tpu_custom_call.1} parent=11 // pred_fallthru
          _
        // Predicated region
        $region37: #{tpu_custom_call.1} parent=11 // pred_check
          %p249 = pneg %p190
        $region38: #{tpu_custom_call.1} parent=11 // pred_check_branch
          %251 = sbr.rel (%p249) target = $region40
        $region39: #{tpu_custom_call.1} parent=11 // pred_region
          _
        $region40: #{tpu_custom_call.1} parent=11 // pred_fallthru
          _
      $region12: #{tpu_custom_call.1} parent=5 // pred_fallthru
        _
      %p252 = scmp.lt.s32.totalorder %s17, 2
      // Predicated region
      $region41: #{tpu_custom_call.1} parent=5 // pred_check
        %p253 = pneg %p252
      $region42: #{tpu_custom_call.1} parent=5 // pred_check_branch
        %255 = sbr.rel (%p253) target = $region44
      $region43: #{tpu_custom_call.1} parent=5 // pred_region
        // Predicated region
        $region45: #{tpu_custom_call.1} parent=43 // pred_check
          %p256 = pneg %p37
        $region46: #{tpu_custom_call.1} parent=43 // pred_check_branch
          %258 = sbr.rel (%p256) target = $region48
        $region47: #{tpu_custom_call.1} parent=43 // pred_region
          %p259 = scmp.lt.s32.totalorder %s17, 1
          %s260 = scalar_select %p259, %s17, 1
          %s261 = smul.addr %s260, 8
          %s262 = scalar_lea.vmem %s0, %s261
        $region48: #{tpu_custom_call.1} parent=43 // pred_fallthru
          _
      $region44: #{tpu_custom_call.1} parent=5 // pred_fallthru
        _
      %p263 = scmp.le.s32.totalorder 1, %s17
      %p264 = scmp.lt.s32.totalorder %s17, 3
      %p265 = pnand %p263, %p264
      %p266 = pneg %p265
      // Predicated region
      $region49: #{tpu_custom_call.1} parent=5 // pred_check
        _
      $region50: #{tpu_custom_call.1} parent=5 // pred_check_branch
        %268 = sbr.rel (%p265) target = $region52
      $region51: #{tpu_custom_call.1} parent=5 // pred_region
        %s269 = ssub.s32 %s17, 1
        %p270 = scmp.lt.s32.totalorder %s22, 1
        %s271 = scalar_select %p270, %s22, 1
        %s272 = smul.addr %s271, 8
        %s273 = scalar_lea.vmem %s0, %s272
        %p274 = pneg %p43
        %p275 = pneg %p40
        %p276 = pneg %p64
        %p277 = pneg %p61
        %p278 = pneg %p85
        %p279 = pneg %p82
        %p280 = pneg %p106
        %p281 = pneg %p103
        %p282 = pneg %p127
        %p283 = pneg %p124
        %p284 = pneg %p148
        %p285 = pneg %p145
        %p286 = pneg %p169
        %p287 = pneg %p166
        %p288 = pneg %p190
        %p289 = pneg %p187
        %p290 = pneg %p216
        %p291 = pneg %p213
        %s292 = sand.u32 %s203, 1
        %s293 = scalar_lea.sflag [#allocation3], %s292
        %s294 = sand.u32 %s203, 1
        %s295 = smul.addr %s294, 8
        %s296 = scalar_lea.vmem [#allocation2], %s295
        %p297 = scmp.lt.s32.totalorder %s22, 1
        %s298 = scalar_select %p297, %s22, 1
        %s299 = smul.addr %s298, 8
        %s300 = scalar_lea.vmem %s0, %s299
        %v301 = vld [vmem:[%s300] sm:$0xff]
        %v302 = vld [vmem:[%s1] sm:$0xf]
        %v303 = vld [vmem:[%s2] sm:$0x1]
        %v305 = vlaneseq
        %v306 = vshrl.u32 %v305, 7
        %v307 = vsub.s32 0, %v306
        %v308 = vrot.slane %v303, %v307
        %vm310 = vcmask 31744
        %v312 = vsel %vm310, %v301, 0
        %vm314 = vcmask 1043456
        %v316 = vsel %vm314, %v302, 0
        %318 = vmatprep.subr.mxu0 0.0
        %319 = vmatpush1.msra.mxu0 %v316
        %320 = vmatprep.subr.mxu0 0.0
        %321 = vmatpush1.msra.mxu0 0.0
        %322 = vmatprep.subr.mxu0 0.0
        %323 = vmatpush1.msra.mxu0 0.0
        %324 = vmatprep.subr.mxu0 0.0
        %325 = vmatpush1.msra.mxu0 0.0
        %326 = vmatprep.subr.mxu0 0.0
        %327 = vmatpush1.msra.mxu0 0.0
        %328 = vmatprep.subr.mxu0 0.0
        %329 = vmatpush1.msra.mxu0 0.0
        %330 = vmatprep.subr.mxu0 0.0
        %331 = vmatpush1.msra.mxu0 0.0
        %332 = vmatprep.subr.mxu0 0.0
        %333 = vmatpush1.msra.mxu0 0.0
        %334 = vmatprep.subr.mxu0 0.0
        %335 = vmatpush1.msra.mxu0 0.0
        %336 = vmatprep.subr.mxu0 0.0
        %337 = vmatpush1.msra.mxu0 0.0
        %338 = vmatprep.subr.mxu0 0.0
        %339 = vmatpush1.msra.mxu0 0.0
        %340 = vmatprep.subr.mxu0 0.0
        %341 = vmatpush1.msra.mxu0 0.0
        %342 = vmatprep.subr.mxu0 0.0
        %343 = vmatpush1.msra.mxu0 0.0
        %344 = vmatprep.subr.mxu0 0.0
        %345 = vmatpush1.msra.mxu0 0.0
        %346 = vmatprep.subr.mxu0 0.0
        %347 = vmatpush1.msra.mxu0 0.0
        %348 = vmatprep.subr.mxu0 0.0
        %349 = vmatpush1.msra.mxu0 0.0
        %350 = vmatprep.subr.mxu0 0.0
        %351 = vmatpush1.msra.mxu0 0.0
        %352 = vmatprep.subr.mxu0 0.0
        %353 = vmatpush1.msra.mxu0 0.0
        %354 = vmatprep.subr.mxu0 0.0
        %355 = vmatpush1.msra.mxu0 0.0
        %356 = vmatprep.subr.mxu0 0.0
        %357 = vmatpush1.msra.mxu0 0.0
        %358 = vmatprep.subr.mxu0 0.0
        %359 = vmatpush1.msra.mxu0 0.0
        %360 = vmatprep.subr.mxu0 0.0
        %361 = vmatpush1.msra.mxu0 0.0
        %362 = vmatprep.subr.mxu0 0.0
        %363 = vmatpush1.msra.mxu0 0.0
        %364 = vmatprep.subr.mxu0 0.0
        %365 = vmatpush1.msra.mxu0 0.0
        %366 = vmatprep.subr.mxu0 0.0
        %367 = vmatpush1.msra.mxu0 0.0
        %368 = vmatprep.subr.mxu0 0.0
        %369 = vmatpush1.msra.mxu0 0.0
        %370 = vmatprep.subr.mxu0 0.0
        %371 = vmatpush1.msra.mxu0 0.0
        %372 = vmatprep.subr.mxu0 0.0
        %373 = vmatpush1.msra.mxu0 0.0
        %374 = vmatprep.subr.mxu0 0.0
        %375 = vmatpush1.msra.mxu0 0.0
        %376 = vmatprep.subr.mxu0 0.0
        %377 = vmatpush1.msra.mxu0 0.0
        %378 = vmatprep.subr.mxu0 0.0
        %379 = vmatpush1.msra.mxu0 0.0
        %380 = vmatprep.subr.mxu0 0.0
        %381 = vmatpush1.msra.mxu0 0.0
        %382 = vmatprep.mubr.f32.mxu0 0.0
        %383 = vmatmul.mubr.f32.gmra.mrb[0].mxu0 %v312
        %v384 = vpop.f32.mrb[0].mxu0
        %v385 = vadd.f32 %v308, %v384
        %v386 = vpop.f32.mrb[0].mxu0
        %387 = vdwg.mxu0
        %v388 = vld [vmem:[%s3] sm:$0xff]
        %v389 = vld [vmem:[%s3 + $0x8] sm:$0xff]
        %v390 = vld [vmem:[%s3 + $0x10] sm:$0xff]
        %v391 = vld [vmem:[%s3 + $0x18] sm:$0xff]
        %vm392 = vcmask 261120
        %v394 = vsel %vm392, %v385, 0
        %396 = vmatprep.subr.mxu0 0.0
        %397 = vmatpush1.msra.mxu0 %v388
        %398 = vmatprep.subr.mxu0 0.0
        %399 = vmatpush1.msra.mxu0 %v389
        %400 = vmatprep.subr.mxu0 0.0
        %401 = vmatpush1.msra.mxu0 %v390
        %402 = vmatprep.subr.mxu0 0.0
        %403 = vmatpush1.msra.mxu0 %v391
        %404 = vmatprep.subr.mxu0 0.0
        %405 = vmatpush1.msra.mxu0 0.0
        %406 = vmatprep.subr.mxu0 0.0
        %407 = vmatpush1.msra.mxu0 0.0
        %408 = vmatprep.subr.mxu0 0.0
        %409 = vmatpush1.msra.mxu0 0.0
        %410 = vmatprep.subr.mxu0 0.0
        %411 = vmatpush1.msra.mxu0 0.0
        %412 = vmatprep.subr.mxu0 0.0
        %413 = vmatpush1.msra.mxu0 0.0
        %414 = vmatprep.subr.mxu0 0.0
        %415 = vmatpush1.msra.mxu0 0.0
        %416 = vmatprep.subr.mxu0 0.0
        %417 = vmatpush1.msra.mxu0 0.0
        %418 = vmatprep.subr.mxu0 0.0
        %419 = vmatpush1.msra.mxu0 0.0
        %420 = vmatprep.subr.mxu0 0.0
        %421 = vmatpush1.msra.mxu0 0.0
        %422 = vmatprep.subr.mxu0 0.0
        %423 = vmatpush1.msra.mxu0 0.0
        %424 = vmatprep.subr.mxu0 0.0
        %425 = vmatpush1.msra.mxu0 0.0
        %426 = vmatprep.subr.mxu0 0.0
        %427 = vmatpush1.msra.mxu0 0.0
        %428 = vmatprep.subr.mxu0 0.0
        %429 = vmatpush1.msra.mxu0 0.0
        %430 = vmatprep.subr.mxu0 0.0
        %431 = vmatpush1.msra.mxu0 0.0
        %432 = vmatprep.subr.mxu0 0.0
        %433 = vmatpush1.msra.mxu0 0.0
        %434 = vmatprep.subr.mxu0 0.0
        %435 = vmatpush1.msra.mxu0 0.0
        %436 = vmatprep.subr.mxu0 0.0
        %437 = vmatpush1.msra.mxu0 0.0
        %438 = vmatprep.subr.mxu0 0.0
        %439 = vmatpush1.msra.mxu0 0.0
        %440 = vmatprep.subr.mxu0 0.0
        %441 = vmatpush1.msra.mxu0 0.0
        %442 = vmatprep.subr.mxu0 0.0
        %443 = vmatpush1.msra.mxu0 0.0
        %444 = vmatprep.subr.mxu0 0.0
        %445 = vmatpush1.msra.mxu0 0.0
        %446 = vmatprep.subr.mxu0 0.0
        %447 = vmatpush1.msra.mxu0 0.0
        %448 = vmatprep.subr.mxu0 0.0
        %449 = vmatpush1.msra.mxu0 0.0
        %450 = vmatprep.subr.mxu0 0.0
        %451 = vmatpush1.msra.mxu0 0.0
        %452 = vmatprep.subr.mxu0 0.0
        %453 = vmatpush1.msra.mxu0 0.0
        %454 = vmatprep.subr.mxu0 0.0
        %455 = vmatpush1.msra.mxu0 0.0
        %456 = vmatprep.subr.mxu0 0.0
        %457 = vmatpush1.msra.mxu0 0.0
        %458 = vmatprep.subr.mxu0 0.0
        %459 = vmatpush1.msra.mxu0 0.0
        %460 = vmatprep.mubr.f32.mxu0 0.0
        %461 = vmatmul.mubr.f32.gmra.mrb[0].mxu0 %v394
        %v462 = vpop.f32.mrb[0].mxu0
        %v463 = vadd.f32 0.0, %v462
        %v464 = vpop.f32.mrb[0].mxu0
        %465 = vdwg.mxu0
        %v466 = vrot.slane %v463, 4
        %v467 = vmax.f32 %v463, %v466
        %v468 = vrot.slane %v467, 2
        %v469 = vmax.f32 %v467, %v468
        %v470 = vrot.slane %v469, 1
        %v471 = vmax.f32 %v469, %v470
        %v472 = vsub.f32 %v463, %v471
        %v473 = vmul.f32 %v472, 1.442695
        %v474 = vpow.pop %v473
        %v475 = vrot.slane %v474, 4
        %v476 = vadd.f32 %v474, %v475
        %v477 = vrot.slane %v476, 2
        %v478 = vadd.f32 %v476, %v477
        %v479 = vrot.slane %v478, 1
        %v480 = vadd.f32 %v478, %v479
        %v481 = vrcp.pop %v480
        %v482 = vmul.f32 %v474, %v481
        %483 = vadd.xlane.f32.xlu0 %v482
        %v484 = vpop.xlane.xlu0 %483
        %v485 = vadd.f32 %v484, 1e-09
        %v486 = vrcp.pop %v485
        %v487 = vmul.f32 %v482, %v486
        %v488 = vld [vmem:[%s4] sm:$0xff]
        %v489 = vld [vmem:[%s4 + $0x8] sm:$0xff]
        %v490 = vld [vmem:[%s4 + $0x10] sm:$0xff]
        %v491 = vld [vmem:[%s4 + $0x18] sm:$0xff]
        %v492 = vld [vmem:[%s4 + $0x20] sm:$0xff]
        %v493 = vld [vmem:[%s4 + $0x28] sm:$0xff]
        %v494 = vld [vmem:[%s4 + $0x30] sm:$0xff]
        %v495 = vld [vmem:[%s4 + $0x38] sm:$0xff]
        %v496 = vld [vmem:[%s4 + $0x40] sm:$0xff]
        %v497 = vld [vmem:[%s4 + $0x48] sm:$0xff]
        %v498 = vld [vmem:[%s4 + $0x50] sm:$0xff]
        %v499 = vld [vmem:[%s4 + $0x58] sm:$0xff]
        %v500 = vld [vmem:[%s4 + $0x60] sm:$0xff]
        %v501 = vld [vmem:[%s4 + $0x68] sm:$0xff]
        %v502 = vld [vmem:[%s4 + $0x70] sm:$0xff]
        %v503 = vld [vmem:[%s4 + $0x78] sm:$0xff]
        %v504 = vld [vmem:[%s5] sm:$0x1]
        %v506 = vlaneseq
        %v507 = vshrl.u32 %v506, 7
        %v508 = vsub.s32 0, %v507
        %v509 = vrot.slane %v504, %v508
        %511 = vmatprep.subr.mxu0 0.0
        %512 = vmatpush1.msra.mxu0 %v488
        %513 = vmatprep.subr.mxu0 0.0
        %514 = vmatpush1.msra.mxu0 %v489
        %515 = vmatprep.subr.mxu0 0.0
        %516 = vmatpush1.msra.mxu0 %v490
        %517 = vmatprep.subr.mxu0 0.0
        %518 = vmatpush1.msra.mxu0 %v491
        %519 = vmatprep.subr.mxu0 0.0
        %520 = vmatpush1.msra.mxu0 %v492
        %521 = vmatprep.subr.mxu0 0.0
        %522 = vmatpush1.msra.mxu0 %v493
        %523 = vmatprep.subr.mxu0 0.0
        %524 = vmatpush1.msra.mxu0 %v494
        %525 = vmatprep.subr.mxu0 0.0
        %526 = vmatpush1.msra.mxu0 %v495
        %527 = vmatprep.subr.mxu0 0.0
        %528 = vmatpush1.msra.mxu0 %v496
        %529 = vmatprep.subr.mxu0 0.0
        %530 = vmatpush1.msra.mxu0 %v497
        %531 = vmatprep.subr.mxu0 0.0
        %532 = vmatpush1.msra.mxu0 %v498
        %533 = vmatprep.subr.mxu0 0.0
        %534 = vmatpush1.msra.mxu0 %v499
        %535 = vmatprep.subr.mxu0 0.0
        %536 = vmatpush1.msra.mxu0 %v500
        %537 = vmatprep.subr.mxu0 0.0
        %538 = vmatpush1.msra.mxu0 %v501
        %539 = vmatprep.subr.mxu0 0.0
        %540 = vmatpush1.msra.mxu0 %v502
        %541 = vmatprep.subr.mxu0 0.0
        %542 = vmatpush1.msra.mxu0 %v503
        %543 = vmatprep.subr.mxu0 0.0
        %544 = vmatpush1.msra.mxu0 0.0
        %545 = vmatprep.subr.mxu0 0.0
        %546 = vmatpush1.msra.mxu0 0.0
        %547 = vmatprep.subr.mxu0 0.0
        %548 = vmatpush1.msra.mxu0 0.0
        %549 = vmatprep.subr.mxu0 0.0
        %550 = vmatpush1.msra.mxu0 0.0
        %551 = vmatprep.subr.mxu0 0.0
        %552 = vmatpush1.msra.mxu0 0.0
        %553 = vmatprep.subr.mxu0 0.0
        %554 = vmatpush1.msra.mxu0 0.0
        %555 = vmatprep.subr.mxu0 0.0
        %556 = vmatpush1.msra.mxu0 0.0
        %557 = vmatprep.subr.mxu0 0.0
        %558 = vmatpush1.msra.mxu0 0.0
        %559 = vmatprep.subr.mxu0 0.0
        %560 = vmatpush1.msra.mxu0 0.0
        %561 = vmatprep.subr.mxu0 0.0
        %562 = vmatpush1.msra.mxu0 0.0
        %563 = vmatprep.subr.mxu0 0.0
        %564 = vmatpush1.msra.mxu0 0.0
        %565 = vmatprep.subr.mxu0 0.0
        %566 = vmatpush1.msra.mxu0 0.0
        %567 = vmatprep.subr.mxu0 0.0
        %568 = vmatpush1.msra.mxu0 0.0
        %569 = vmatprep.subr.mxu0 0.0
        %570 = vmatpush1.msra.mxu0 0.0
        %571 = vmatprep.subr.mxu0 0.0
        %572 = vmatpush1.msra.mxu0 0.0
        %573 = vmatprep.subr.mxu0 0.0
        %574 = vmatpush1.msra.mxu0 0.0
        %575 = vmatprep.mubr.f32.mxu0 0.0
        %576 = vmatmul.mubr.f32.gmra.mrb[0].mxu0 %v487
        %v577 = vpop.f32.mrb[0].mxu0
        %v578 = vadd.f32 %v509, %v577
        %v579 = vpop.f32.mrb[0].mxu0
        %580 = vdwg.mxu0
        %v581 = vld [vmem:[%s6] sm:$0xff]
        %v582 = vld [vmem:[%s6 + $0x8] sm:$0xff]
        %v583 = vld [vmem:[%s6 + $0x10] sm:$0xff]
        %v584 = vld [vmem:[%s6 + $0x18] sm:$0xff]
        %v585 = vld [vmem:[%s7] sm:$0x1]
        %v587 = vlaneseq
        %v588 = vshrl.u32 %v587, 7
        %v589 = vsub.s32 0, %v588
        %v590 = vrot.slane %v585, %v589
        %v593 = vsel %vm392, %v578, 0
        %595 = vmatprep.subr.mxu0 0.0
        %596 = vmatpush1.msra.mxu0 %v581
        %597 = vmatprep.subr.mxu0 0.0
        %598 = vmatpush1.msra.mxu0 %v582
        %599 = vmatprep.subr.mxu0 0.0
        %600 = vmatpush1.msra.mxu0 %v583
        %601 = vmatprep.subr.mxu0 0.0
        %602 = vmatpush1.msra.mxu0 %v584
        %603 = vmatprep.subr.mxu0 0.0
        %604 = vmatpush1.msra.mxu0 0.0
        %605 = vmatprep.subr.mxu0 0.0
        %606 = vmatpush1.msra.mxu0 0.0
        %607 = vmatprep.subr.mxu0 0.0
        %608 = vmatpush1.msra.mxu0 0.0
        %609 = vmatprep.subr.mxu0 0.0
        %610 = vmatpush1.msra.mxu0 0.0
        %611 = vmatprep.subr.mxu0 0.0
        %612 = vmatpush1.msra.mxu0 0.0
        %613 = vmatprep.subr.mxu0 0.0
        %614 = vmatpush1.msra.mxu0 0.0
        %615 = vmatprep.subr.mxu0 0.0
        %616 = vmatpush1.msra.mxu0 0.0
        %617 = vmatprep.subr.mxu0 0.0
        %618 = vmatpush1.msra.mxu0 0.0
        %619 = vmatprep.subr.mxu0 0.0
        %620 = vmatpush1.msra.mxu0 0.0
        %621 = vmatprep.subr.mxu0 0.0
        %622 = vmatpush1.msra.mxu0 0.0
        %623 = vmatprep.subr.mxu0 0.0
        %624 = vmatpush1.msra.mxu0 0.0
        %625 = vmatprep.subr.mxu0 0.0
        %626 = vmatpush1.msra.mxu0 0.0
        %627 = vmatprep.subr.mxu0 0.0
        %628 = vmatpush1.msra.mxu0 0.0
        %629 = vmatprep.subr.mxu0 0.0
        %630 = vmatpush1.msra.mxu0 0.0
        %631 = vmatprep.subr.mxu0 0.0
        %632 = vmatpush1.msra.mxu0 0.0
        %633 = vmatprep.subr.mxu0 0.0
        %634 = vmatpush1.msra.mxu0 0.0
        %635 = vmatprep.subr.mxu0 0.0
        %636 = vmatpush1.msra.mxu0 0.0
        %637 = vmatprep.subr.mxu0 0.0
        %638 = vmatpush1.msra.mxu0 0.0
        %639 = vmatprep.subr.mxu0 0.0
        %640 = vmatpush1.msra.mxu0 0.0
        %641 = vmatprep.subr.mxu0 0.0
        %642 = vmatpush1.msra.mxu0 0.0
        %643 = vmatprep.subr.mxu0 0.0
        %644 = vmatpush1.msra.mxu0 0.0
        %645 = vmatprep.subr.mxu0 0.0
        %646 = vmatpush1.msra.mxu0 0.0
        %647 = vmatprep.subr.mxu0 0.0
        %648 = vmatpush1.msra.mxu0 0.0
        %649 = vmatprep.subr.mxu0 0.0
        %650 = vmatpush1.msra.mxu0 0.0
        %651 = vmatprep.subr.mxu0 0.0
        %652 = vmatpush1.msra.mxu0 0.0
        %653 = vmatprep.subr.mxu0 0.0
        %654 = vmatpush1.msra.mxu0 0.0
        %655 = vmatprep.subr.mxu0 0.0
        %656 = vmatpush1.msra.mxu0 0.0
        %657 = vmatprep.subr.mxu0 0.0
        %658 = vmatpush1.msra.mxu0 0.0
        %659 = vmatprep.mubr.f32.mxu0 0.0
        %660 = vmatmul.mubr.f32.gmra.mrb[0].mxu0 %v593
        %v661 = vpop.f32.mrb[0].mxu0
        %v662 = vadd.f32 %v590, %v661
        %v663 = vpop.f32.mrb[0].mxu0
        %664 = vdwg.mxu0
        %v665 = vadd.f32 %v385, %v662
        %666 = vst.msk [vmem:[%s296] sm:$0xff] %vm392, %v665
        %s667 = sand.u32 %s203, 1
        %s668 = scalar_lea.sflag [#allocation3], %s667
        %s669 = sand.u32 %s203, 1
        %s670 = smul.addr %s669, 8
        %s671 = scalar_lea.vmem [#allocation2], %s670
        // Predicated region
        $region53: #{tpu_custom_call.1} parent=51 // pred_check
          %p672 = pneg %p213
        $region54: #{tpu_custom_call.1} parent=51 // pred_check_branch
          %674 = sbr.rel (%p672) target = $region56
        $region55: #{tpu_custom_call.1} parent=51 // pred_region
          %s676 = ssub.s32 128, 128
          %677 = vsyncadd %s668, %s676
          %s678 = smul.addr %s22, 128
          %s679 = scalar_lea.hbm %s8, %s678
          %s681 = sshll.u32 %s671, 4
          %s682 = int_to_ptr.vmem [resolvable:$true] %s681
          %684 = dma.vmem_to_hbm [thread:$0]  %s682, 128, %s679, %s668
        $region56: #{tpu_custom_call.1} parent=51 // pred_fallthru
          _
      $region52: #{tpu_custom_call.1} parent=5 // pred_fallthru
        _
      %p685 = scmp.le.s32.totalorder 2, %s17
      // Predicated region
      $region57: #{tpu_custom_call.1} parent=5 // pred_check
        %p686 = pneg %p685
      $region58: #{tpu_custom_call.1} parent=5 // pred_check_branch
        %688 = sbr.rel (%p686) target = $region60
      $region59: #{tpu_custom_call.1} parent=5 // pred_region
        %s689 = ssub.s32 %s17, 2
        // Predicated region
        $region61: #{tpu_custom_call.1} parent=59 // pred_check
          %p690 = pneg %p219
        $region62: #{tpu_custom_call.1} parent=59 // pred_check_branch
          %692 = sbr.rel (%p690) target = $region64
        $region63: #{tpu_custom_call.1} parent=59 // pred_region
          %s693 = sand.u32 %s204, 1
          %s694 = scalar_lea.sflag [#allocation3], %s693
          %s695 = sand.u32 %s204, 1
          %s696 = smul.addr %s695, 8
          %s697 = scalar_lea.vmem [#allocation2], %s696
          %698 = dma.done %s694, 128
        $region64: #{tpu_custom_call.1} parent=59 // pred_fallthru
          _
      $region60: #{tpu_custom_call.1} parent=5 // pred_fallthru
        _
    $region6: #{tpu_custom_call.1} parent=1 // loop_footer
      %s21 = sadd.s32 1, %s17
    $region7: #{tpu_custom_call.1} parent=1 // loop_footer_branch
      %16 = sbr.rel target = $region3
    $region8: #{tpu_custom_call.1} parent=1 // loop_exit
      _
    %699 = vsyncpa [#allocation3], 1
    %s700 = scalar_lea.sflag [#allocation3], 1
    %701 = vsyncpa %s700, 1

</llo_original>
